<compile_context>
chip_gen: v5e
topology: v5e:2x2
jax: 0.10.0
libtpu: 0.0.40
codegen_flags: <defaults>
</compile_context>

<pallas_src>
import jax
import jax.numpy as jnp
from jax.experimental import pallas as pl
from jax.experimental.pallas import tpu as pltpu

IN_PAD = 8      # padded observation dim (full sublane group)
H_PAD = 128     # padded hidden dim (full lane width)
OUT_PAD = 128   # padded logits dim (lane-dense output slab)
TB = 128        # batch-tile rows per grid step
NEG = -1e30     # final-layer bias pad value (masks pad logits in the softmax)


def _policy_kernel(x_ref, w1_ref, w23_ref, w4_ref, b_ref, o_ref):
    # Layer 1: [TB, IN_PAD]bf16 @ [IN_PAD, H]bf16 -> f32 acc, + b1, tanh (f32).
    h = jnp.dot(x_ref[...], w1_ref[...], preferred_element_type=jnp.float32)
    h = jnp.tanh(h + b_ref[0:1, :])
    # Layers 2 and 3 (weights stacked in one operand; static indexing is free).
    h = jnp.dot(h.astype(jnp.bfloat16), w23_ref[0],
                preferred_element_type=jnp.float32)
    h = jnp.tanh(h + b_ref[1:2, :])
    h = jnp.dot(h.astype(jnp.bfloat16), w23_ref[1],
                preferred_element_type=jnp.float32)
    h = jnp.tanh(h + b_ref[2:3, :])
    # Final linear -> lane-padded logits. Pad lanes get bias -1e30, so they
    # neither win the max nor contribute to the exp-sum below.
    logits = jnp.dot(h.astype(jnp.bfloat16), w4_ref[...],
                     preferred_element_type=jnp.float32) + b_ref[3:4, :]
    # Numerically stable log-softmax over the lane axis (all f32).
    m = jnp.max(logits, axis=-1, keepdims=True)
    z = logits - m
    lse = jnp.log(jnp.sum(jnp.exp(z), axis=-1, keepdims=True))
    o_ref[...] = (z - lse).astype(o_ref.dtype)


def pack_params(params):
    """Pad params to lane/sublane-dense shapes, cast weights to bf16, pack."""
    (w1, b1), (w2, b2), (w3, b3), (w4, b4) = params

    def pad2(a, rows, cols, value=0.0):
        return jnp.pad(a, ((0, rows - a.shape[0]), (0, cols - a.shape[1])),
                       constant_values=value)

    w1_p = pad2(w1, IN_PAD, H_PAD).astype(jnp.bfloat16)
    w23_p = jnp.stack([pad2(w2, H_PAD, H_PAD),
                       pad2(w3, H_PAD, H_PAD)]).astype(jnp.bfloat16)
    w4_p = pad2(w4, H_PAD, OUT_PAD).astype(jnp.bfloat16)
    # All biases in one f32 operand; row 3 (final layer) pads with -1e30.
    b_all = jnp.concatenate([
        pad2(b1, 1, H_PAD),
        pad2(b2, 1, H_PAD),
        pad2(b3, 1, H_PAD),
        pad2(b4, 1, OUT_PAD, value=NEG),
    ], axis=0).astype(jnp.float32)
    return w1_p, w23_p, w4_p, b_all


def policy_forward(x, packed, num_actions):
    """x: [B, num_inputs] f32 -> log-probs [B, num_actions] f32."""
    w1_p, w23_p, w4_p, b_all = packed
    B, num_inputs = x.shape
    b_pad = pl.cdiv(B, TB) * TB

    # Sublane-dense bf16 input slab (zero-padded rows/cols are inert).
    x_p = jnp.zeros((b_pad, IN_PAD), jnp.bfloat16)
    x_p = x_p.at[:B, :num_inputs].set(x.astype(jnp.bfloat16))

    out = pl.pallas_call(
        _policy_kernel,
        out_shape=jax.ShapeDtypeStruct((b_pad, OUT_PAD), jnp.float32),
        grid=(b_pad // TB,),
        in_specs=[
            pl.BlockSpec((TB, IN_PAD), lambda i: (i, 0)),        # x tile
            pl.BlockSpec((IN_PAD, H_PAD), lambda i: (0, 0)),     # w1
            pl.BlockSpec((2, H_PAD, H_PAD), lambda i: (0, 0, 0)),  # w2, w3
            pl.BlockSpec((H_PAD, OUT_PAD), lambda i: (0, 0)),    # w4
            pl.BlockSpec((4, OUT_PAD), lambda i: (0, 0)),        # b1..b4
        ],
        out_specs=pl.BlockSpec((TB, OUT_PAD), lambda i: (i, 0)),
        compiler_params=pltpu.CompilerParams(
            dimension_semantics=("parallel",)),
    )(x_p, w1_p, w23_p, w4_p, b_all)
    return out[:B, :num_actions]


def init_params(key, num_inputs, num_actions, hidden=64):
    """Deterministic synthetic init (uniform, roughly like torch Linear default)."""
    dims = [(num_inputs, hidden), (hidden, hidden), (hidden, hidden),
            (hidden, num_actions)]
    params = []
    for (din, dout) in dims:
        key, kw, kb = jax.random.split(key, 3)
        bound = 1.0 / jnp.sqrt(din)
        w = jax.random.uniform(kw, (din, dout), jnp.float32, -bound, bound)
        b = jax.random.uniform(kb, (1, dout), jnp.float32, -bound, bound)
        params.append((w, b))
    return params


def _reference_forward_f32(x, params):
    h = x
    for i, (w, b) in enumerate(params):
        h = h @ w + b
        if i < len(params) - 1:
            h = jnp.tanh(h)
    return jax.nn.log_softmax(h, axis=-1)


def _reference_forward_bf16(x, params):
    # Mirrors the kernel's precision: bf16 matmul operands, f32 accumulation,
    # f32 tanh / log-softmax.
    h = x.astype(jnp.bfloat16)
    for i, (w, b) in enumerate(params):
        h = jnp.dot(h, w.astype(jnp.bfloat16),
                    preferred_element_type=jnp.float32) + b
        if i < len(params) - 1:
            h = jnp.tanh(h).astype(jnp.bfloat16)
    return jax.nn.log_softmax(h, axis=-1)


if __name__ == "__main__":
    NUM_INPUTS = 4   # CartPole-v1 observation dim
    NUM_ACTIONS = 2  # CartPole-v1 action space
    BATCH = 200      # deliberately not a multiple of the 128-row batch tile

    key = jax.random.PRNGKey(0)
    key, kx = jax.random.split(key)
    x = jax.random.normal(kx, (BATCH, NUM_INPUTS), jnp.float32)
    params = init_params(key, NUM_INPUTS, NUM_ACTIONS)

    packed = pack_params(params)   # one-time packing; reuse across rollout steps
    out = policy_forward(x, packed, NUM_ACTIONS)
    out = jax.block_until_ready(out)

    assert out.shape == (BATCH, NUM_ACTIONS)
    assert bool(jnp.all(jnp.isfinite(out)))
    # Probabilities per row sum to 1.
    assert jnp.allclose(jnp.sum(jnp.exp(out), axis=-1), 1.0, atol=1e-4)
    # Tight check vs. a precision-matched (bf16 matmul, f32 accum) reference.
    ref_bf16 = _reference_forward_bf16(x, params)
    assert jnp.allclose(out, ref_bf16, atol=1e-2, rtol=1e-2), "bf16 ref mismatch"
    # Looser check vs. the full-f32 reference (bf16 quantization tolerance).
    ref_f32 = _reference_forward_f32(x, params)
    assert jnp.allclose(out, ref_f32, atol=5e-2, rtol=5e-2), "f32 ref mismatch"

    # TODO(synk): sample_action / probs_of_action (Categorical sampling,
    # .item(), gather) are host/driver-side utilities, not part of forward.

    print("KERNEL_OK")
</pallas_src>

<mosaic_0001>
module attributes {stable_mosaic.version = 11 : i64} {
  func.func @_policy_kernel(%arg0: i32, %arg1: memref<128x8xbf16, #tpu.memory_space<vmem>>, %arg2: memref<8x128xbf16, #tpu.memory_space<vmem>>, %arg3: memref<2x128x128xbf16, #tpu.memory_space<vmem>>, %arg4: memref<128x128xbf16, #tpu.memory_space<vmem>>, %arg5: memref<4x128xf32, #tpu.memory_space<vmem>>, %arg6: memref<128x128xf32, #tpu.memory_space<vmem>>) attributes {dimension_semantics = [#tpu.dimension_semantics<parallel>], iteration_bounds = array<i64: 2>, scalar_prefetch = 0 : i64, scratch_operands = 0 : i64, tpu.core_type = #tpu.core_type<tc>, window_params = [{transform_indices = @transform_0, window_bounds = array<i64: 128, 8>}, {pipeline_mode = #tpu.pipeline_mode<synchronous>, transform_indices = @transform_1, window_bounds = array<i64: 8, 128>}, {pipeline_mode = #tpu.pipeline_mode<synchronous>, transform_indices = @transform_2, window_bounds = array<i64: 2, 128, 128>}, {pipeline_mode = #tpu.pipeline_mode<synchronous>, transform_indices = @transform_3, window_bounds = array<i64: 128, 128>}, {pipeline_mode = #tpu.pipeline_mode<synchronous>, transform_indices = @transform_4, window_bounds = array<i64: 4, 128>}, {transform_indices = @transform_5, window_bounds = array<i64: 128, 128>}]} {
    %c0 = arith.constant 0 : index
    %c0_0 = arith.constant 0 : index
    %0 = vector.load %arg1[%c0, %c0_0] : memref<128x8xbf16, #tpu.memory_space<vmem>>, vector<128x8xbf16>
    %c0_1 = arith.constant 0 : index
    %c0_2 = arith.constant 0 : index
    %1 = vector.load %arg2[%c0_1, %c0_2] : memref<8x128xbf16, #tpu.memory_space<vmem>>, vector<8x128xbf16>
    %cst = arith.constant dense<0.000000e+00> : vector<128x128xf32>
    %2 = tpu.matmul %0, %1, %cst {dimension_numbers = #tpu.dot_dimension_numbers<[1], [0], [0], [1], [0, 0, 1, 1], [], []>} : vector<128x8xbf16>, vector<8x128xbf16>, vector<128x128xf32> -> vector<128x128xf32>
    %c0_3 = arith.constant 0 : index
    %c0_4 = arith.constant 0 : index
    %3 = vector.load %arg5[%c0_3, %c0_4] : memref<4x128xf32, #tpu.memory_space<vmem>>, vector<1x128xf32>
    %4 = vector.broadcast %3 : vector<1x128xf32> to vector<128x128xf32>
    %5 = arith.addf %2, %4 : vector<128x128xf32>
    %6 = math.tanh %5 : vector<128x128xf32>
    %7 = arith.truncf %6 : vector<128x128xf32> to vector<128x128xbf16>
    %c0_5 = arith.constant 0 : index
    %c0_6 = arith.constant 0 : index
    %c0_7 = arith.constant 0 : index
    %8 = vector.load %arg3[%c0_5, %c0_6, %c0_7] : memref<2x128x128xbf16, #tpu.memory_space<vmem>>, vector<1x128x128xbf16>
    %9 = vector.shape_cast %8 : vector<1x128x128xbf16> to vector<128x128xbf16>
    %cst_8 = arith.constant dense<0.000000e+00> : vector<128x128xf32>
    %10 = tpu.matmul %7, %9, %cst_8 {dimension_numbers = #tpu.dot_dimension_numbers<[1], [0], [0], [1], [0, 0, 1, 1], [], []>} : vector<128x128xbf16>, vector<128x128xbf16>, vector<128x128xf32> -> vector<128x128xf32>
    %c1 = arith.constant 1 : index
    %c0_9 = arith.constant 0 : index
    %11 = vector.load %arg5[%c1, %c0_9] : memref<4x128xf32, #tpu.memory_space<vmem>>, vector<1x128xf32>
    %12 = vector.broadcast %11 : vector<1x128xf32> to vector<128x128xf32>
    %13 = arith.addf %10, %12 : vector<128x128xf32>
    %14 = math.tanh %13 : vector<128x128xf32>
    %15 = arith.truncf %14 : vector<128x128xf32> to vector<128x128xbf16>
    %c1_10 = arith.constant 1 : index
    %c0_11 = arith.constant 0 : index
    %c0_12 = arith.constant 0 : index
    %16 = vector.load %arg3[%c1_10, %c0_11, %c0_12] : memref<2x128x128xbf16, #tpu.memory_space<vmem>>, vector<1x128x128xbf16>
    %17 = vector.shape_cast %16 : vector<1x128x128xbf16> to vector<128x128xbf16>
    %cst_13 = arith.constant dense<0.000000e+00> : vector<128x128xf32>
    %18 = tpu.matmul %15, %17, %cst_13 {dimension_numbers = #tpu.dot_dimension_numbers<[1], [0], [0], [1], [0, 0, 1, 1], [], []>} : vector<128x128xbf16>, vector<128x128xbf16>, vector<128x128xf32> -> vector<128x128xf32>
    %c2 = arith.constant 2 : index
    %c0_14 = arith.constant 0 : index
    %19 = vector.load %arg5[%c2, %c0_14] : memref<4x128xf32, #tpu.memory_space<vmem>>, vector<1x128xf32>
    %20 = vector.broadcast %19 : vector<1x128xf32> to vector<128x128xf32>
    %21 = arith.addf %18, %20 : vector<128x128xf32>
    %22 = math.tanh %21 : vector<128x128xf32>
    %23 = arith.truncf %22 : vector<128x128xf32> to vector<128x128xbf16>
    %c0_15 = arith.constant 0 : index
    %c0_16 = arith.constant 0 : index
    %24 = vector.load %arg4[%c0_15, %c0_16] : memref<128x128xbf16, #tpu.memory_space<vmem>>, vector<128x128xbf16>
    %cst_17 = arith.constant dense<0.000000e+00> : vector<128x128xf32>
    %25 = tpu.matmul %23, %24, %cst_17 {dimension_numbers = #tpu.dot_dimension_numbers<[1], [0], [0], [1], [0, 0, 1, 1], [], []>} : vector<128x128xbf16>, vector<128x128xbf16>, vector<128x128xf32> -> vector<128x128xf32>
    %c3 = arith.constant 3 : index
    %c0_18 = arith.constant 0 : index
    %26 = vector.load %arg5[%c3, %c0_18] : memref<4x128xf32, #tpu.memory_space<vmem>>, vector<1x128xf32>
    %27 = vector.broadcast %26 : vector<1x128xf32> to vector<128x128xf32>
    %28 = arith.addf %25, %27 : vector<128x128xf32>
    %cst_19 = arith.constant dense<0xFF800000> : vector<128xf32>
    %29 = vector.multi_reduction <maximumf>, %28, %cst_19 [1] : vector<128x128xf32> to vector<128xf32>
    %30 = vector.shape_cast %29 : vector<128xf32> to vector<128x1xf32>
    %31 = vector.broadcast %30 : vector<128x1xf32> to vector<128x128xf32>
    %32 = arith.subf %28, %31 : vector<128x128xf32>
    %33 = math.exp %32 : vector<128x128xf32>
    %cst_20 = arith.constant dense<0.000000e+00> : vector<128xf32>
    %34 = vector.multi_reduction <add>, %33, %cst_20 [1] : vector<128x128xf32> to vector<128xf32>
    %35 = vector.shape_cast %34 : vector<128xf32> to vector<128x1xf32>
    %36 = math.log %35 : vector<128x1xf32>
    %37 = vector.broadcast %36 : vector<128x1xf32> to vector<128x128xf32>
    %38 = arith.subf %32, %37 : vector<128x128xf32>
    %c0_21 = arith.constant 0 : index
    %c0_22 = arith.constant 0 : index
    %39 = vector.load %arg6[%c0_21, %c0_22] : memref<128x128xf32, #tpu.memory_space<vmem>>, vector<128x128xf32>
    tpu.vector_store %arg6[%c0_21, %c0_22], %38 {strides = array<i32>} : memref<128x128xf32, #tpu.memory_space<vmem>>, vector<128x128xf32>,
    return
  }
  func.func @transform_0(%arg0: i32) -> (i32, i32) {
    %c0_i32 = arith.constant 0 : i32
    %c0_i32_0 = arith.constant 0 : i32
    return %arg0, %c0_i32 : i32, i32
  }
  func.func @transform_1(%arg0: i32) -> (i32, i32) {
    %c0_i32 = arith.constant 0 : i32
    %c0_i32_0 = arith.constant 0 : i32
    %c0_i32_1 = arith.constant 0 : i32
    return %c0_i32, %c0_i32_0 : i32, i32
  }
  func.func @transform_2(%arg0: i32) -> (i32, i32, i32) {
    %c0_i32 = arith.constant 0 : i32
    %c0_i32_0 = arith.constant 0 : i32
    %c0_i32_1 = arith.constant 0 : i32
    %c0_i32_2 = arith.constant 0 : i32
    return %c0_i32, %c0_i32_0, %c0_i32_1 : i32, i32, i32
  }
  func.func @transform_3(%arg0: i32) -> (i32, i32) {
    %c0_i32 = arith.constant 0 : i32
    %c0_i32_0 = arith.constant 0 : i32
    %c0_i32_1 = arith.constant 0 : i32
    return %c0_i32, %c0_i32_0 : i32, i32
  }
  func.func @transform_4(%arg0: i32) -> (i32, i32) {
    %c0_i32 = arith.constant 0 : i32
    %c0_i32_0 = arith.constant 0 : i32
    %c0_i32_1 = arith.constant 0 : i32
    return %c0_i32, %c0_i32_0 : i32, i32
  }
  func.func @transform_5(%arg0: i32) -> (i32, i32) {
    %c0_i32 = arith.constant 0 : i32
    %c0_i32_0 = arith.constant 0 : i32
    return %arg0, %c0_i32 : i32, i32
  }
}

</mosaic_0001>

<llo_original>
// kernel: tpu_custom_call.1
$region0: #{tpu_custom_call.1}
  #allocation0 [shape = 'u32[]', space=smem, size = 0x4, offset = 0x4, fixed_abs, tag = 'smem constant byte address 0x4 - core index']
  #allocation1 [shape = 'u32[72,128]{1,0:T(1,128)}', space=vmem, size = 0x9000, scoped, tag = 'internal scratch']
  %s0 = inlined_call_operand.vmem [shape: bf16[256,8], index: 0, kind: input, shape index: {}]
  %s1 = inlined_call_operand.vmem [shape: bf16[8,128], index: 1, kind: input, shape index: {}]
  %s2 = inlined_call_operand.vmem [shape: bf16[2,128,128], index: 2, kind: input, shape index: {}]
  %s3 = inlined_call_operand.hbm [shape: bf16[128,128], index: 3, kind: input, shape index: {}]
  %s4 = inlined_call_operand.vmem [shape: f32[4,128], index: 4, kind: input, shape index: {}]
  %s5 = inlined_call_operand.hbm [shape: f32[256,128], index: 5, kind: output, shape index: {}]
  %s6 = sld [smem:[#allocation0]]
  $region57: #{tpu_custom_call.1} parent=0
    _
  %s8 = ssub.s32 1, %s6
  %s9 = scalar_select 0, %s8, %s6
  $region1: #{tpu_custom_call.1} parent=0
    #allocation2 [shape = 'u8[32768]{0}', space=vmem, size = 0x8000, scoped, tag = 'input window, operand 3, single buffered']
    #allocation3 [shape = 's32[2]{0}', space=sflag, size = 0x8, scoped, tag = 'scoped memory for tpu_custom_call.1']
    #allocation4 [shape = 's32[2]{0}', space=sflag, size = 0x8, scoped, tag = 'scoped memory for tpu_custom_call.1']
    #allocation5 [shape = 'u8[131072]{0}', space=vmem, size = 0x20000, scoped, tag = 'output window, operand 0']
    %10 = vsyncpa [#allocation3], 0
    %11 = vsyncpa [#allocation4], 0
    %s12 = scalar_lea.sflag [#allocation4], 1
    %13 = vsyncpa %s12, 0
    loop: start=0, step=1, limit=4
    $region2: #{tpu_custom_call.1} parent=1 // loop_pre_header
      _
    $region3: #{tpu_custom_call.1} parent=1 // loop_header
      %s15 = sphi 0, %s19
      %p16 = scmp.ge.s32.totalorder %s15, 4
      %s25 = sphi 0, %s27
      %s28 = sphi 0, %s25
      %s29 = sphi 0, %s28
      %s45 = sphi 0, %s29
      %s49 = sphi 0, %s49
      %s51 = sphi 0, %s49
      %s52 = sphi 0, %s51
      %s66 = sphi 0, %s52
      %s70 = sphi 0, %s70
      %s72 = sphi 0, %s70
      %s73 = sphi 0, %s72
      %s87 = sphi 0, %s73
      %s91 = sphi 0, %s91
      %s93 = sphi 0, %s91
      %s94 = sphi 0, %s93
      %s108 = sphi 0, %s94
      %s112 = sphi 0, %s112
      %s114 = sphi 0, %s112
      %s115 = sphi 0, %s114
      %s129 = sphi 0, %s115
      %s135 = sphi 0, %s137
      %s138 = sphi 0, %s135
      %s139 = sphi 0, %s138
      %s155 = sphi 0, %s139
    $region4: #{tpu_custom_call.1} parent=1 // loop_header_branch
      %18 = sbr.rel (%p16) target = $region8
    $region5: #{tpu_custom_call.1} parent=1 // loop_body
      %s20 = ssub.s32 %s15, 1
      %s21 = ssub.s32 %s15, 2
      %s22 = sadd.s32 %s15, 1
      %s23 = ssub.s32 %s15, %s22
      %p24 = scmp.eq.s32.totalorder %s23, 0
      %s26 = sadd.s32 %s25, 1
      %s27 = scalar_select %p24, %s25, %s26
      %p30 = pneg %p24
      %p31 = scmp.eq.s32.totalorder %s15, 1
      %p32 = por %p30, %p31
      %p33 = scmp.ne.s32.totalorder %s25, %s28
      %p34 = scmp.eq.s32.totalorder %s15, 0
      %p35 = por %p33, %p34
      %p36 = scmp.ne.s32.totalorder %s25, %s28
      %p37 = scmp.eq.s32.totalorder %s20, 1
      %p38 = por %p36, %p37
      %p39 = scmp.ne.s32.totalorder %s28, %s29
      %p40 = scmp.eq.s32.totalorder %s20, 0
      %p41 = por %p39, %p40
      %p42 = scmp.ne.s32.totalorder %s28, %s29
      %p43 = scmp.eq.s32.totalorder %s21, 1
      %p44 = por %p42, %p43
      %p46 = scmp.ne.s32.totalorder %s29, %s45
      %p47 = scmp.eq.s32.totalorder %s21, 0
      %p48 = por %p46, %p47
      %s50 = sadd.s32 %s49, 1
      %p53 = scmp.eq.s32.totalorder %s15, 1
      %p54 = scmp.ne.s32.totalorder %s49, %s51
      %p55 = scmp.eq.s32.totalorder %s15, 0
      %p56 = por %p54, %p55
      %p57 = scmp.ne.s32.totalorder %s49, %s51
      %p58 = scmp.eq.s32.totalorder %s20, 1
      %p59 = por %p57, %p58
      %p60 = scmp.ne.s32.totalorder %s51, %s52
      %p61 = scmp.eq.s32.totalorder %s20, 0
      %p62 = por %p60, %p61
      %p63 = scmp.ne.s32.totalorder %s51, %s52
      %p64 = scmp.eq.s32.totalorder %s21, 1
      %p65 = por %p63, %p64
      %p67 = scmp.ne.s32.totalorder %s52, %s66
      %p68 = scmp.eq.s32.totalorder %s21, 0
      %p69 = por %p67, %p68
      %s71 = sadd.s32 %s70, 1
      %p74 = scmp.eq.s32.totalorder %s15, 1
      %p75 = scmp.ne.s32.totalorder %s70, %s72
      %p76 = scmp.eq.s32.totalorder %s15, 0
      %p77 = por %p75, %p76
      %p78 = scmp.ne.s32.totalorder %s70, %s72
      %p79 = scmp.eq.s32.totalorder %s20, 1
      %p80 = por %p78, %p79
      %p81 = scmp.ne.s32.totalorder %s72, %s73
      %p82 = scmp.eq.s32.totalorder %s20, 0
      %p83 = por %p81, %p82
      %p84 = scmp.ne.s32.totalorder %s72, %s73
      %p85 = scmp.eq.s32.totalorder %s21, 1
      %p86 = por %p84, %p85
      %p88 = scmp.ne.s32.totalorder %s73, %s87
      %p89 = scmp.eq.s32.totalorder %s21, 0
      %p90 = por %p88, %p89
      %s92 = sadd.s32 %s91, 1
      %p95 = scmp.eq.s32.totalorder %s15, 1
      %p96 = scmp.ne.s32.totalorder %s91, %s93
      %p97 = scmp.eq.s32.totalorder %s15, 0
      %p98 = por %p96, %p97
      %p99 = scmp.ne.s32.totalorder %s91, %s93
      %p100 = scmp.eq.s32.totalorder %s20, 1
      %p101 = por %p99, %p100
      %p102 = scmp.ne.s32.totalorder %s93, %s94
      %p103 = scmp.eq.s32.totalorder %s20, 0
      %p104 = por %p102, %p103
      %p105 = scmp.ne.s32.totalorder %s93, %s94
      %p106 = scmp.eq.s32.totalorder %s21, 1
      %p107 = por %p105, %p106
      %p109 = scmp.ne.s32.totalorder %s94, %s108
      %p110 = scmp.eq.s32.totalorder %s21, 0
      %p111 = por %p109, %p110
      %s113 = sadd.s32 %s112, 1
      %p116 = scmp.eq.s32.totalorder %s15, 1
      %p117 = scmp.ne.s32.totalorder %s112, %s114
      %p118 = scmp.eq.s32.totalorder %s15, 0
      %p119 = por %p117, %p118
      %p120 = scmp.ne.s32.totalorder %s112, %s114
      %p121 = scmp.eq.s32.totalorder %s20, 1
      %p122 = por %p120, %p121
      %p123 = scmp.ne.s32.totalorder %s114, %s115
      %p124 = scmp.eq.s32.totalorder %s20, 0
      %p125 = por %p123, %p124
      %p126 = scmp.ne.s32.totalorder %s114, %s115
      %p127 = scmp.eq.s32.totalorder %s21, 1
      %p128 = por %p126, %p127
      %p130 = scmp.ne.s32.totalorder %s115, %s129
      %p131 = scmp.eq.s32.totalorder %s21, 0
      %p132 = por %p130, %p131
      %s133 = ssub.s32 %s15, %s22
      %p134 = scmp.eq.s32.totalorder %s133, 0
      %s136 = sadd.s32 %s135, 1
      %s137 = scalar_select %p134, %s135, %s136
      %p140 = pneg %p134
      %p141 = scmp.eq.s32.totalorder %s15, 1
      %p142 = por %p140, %p141
      %p143 = scmp.ne.s32.totalorder %s135, %s138
      %p144 = scmp.eq.s32.totalorder %s15, 0
      %p145 = por %p143, %p144
      %p146 = scmp.ne.s32.totalorder %s135, %s138
      %p147 = scmp.eq.s32.totalorder %s20, 1
      %p148 = por %p146, %p147
      %p149 = scmp.ne.s32.totalorder %s138, %s139
      %p150 = scmp.eq.s32.totalorder %s20, 0
      %p151 = por %p149, %p150
      %p152 = scmp.ne.s32.totalorder %s138, %s139
      %p153 = scmp.eq.s32.totalorder %s21, 1
      %p154 = por %p152, %p153
      %p156 = scmp.ne.s32.totalorder %s139, %s155
      %p157 = scmp.eq.s32.totalorder %s21, 0
      %p158 = por %p156, %p157
      %p159 = scmp.le.s32.totalorder 1, %s15
      %p160 = scmp.lt.s32.totalorder %s15, 3
      %p161 = pnand %p159, %p160
      %p162 = pneg %p161
      // Predicated region
      $region9: #{tpu_custom_call.1} parent=5 // pred_check
        _
      $region10: #{tpu_custom_call.1} parent=5 // pred_check_branch
        %164 = sbr.rel (%p161) target = $region12
      $region11: #{tpu_custom_call.1} parent=5 // pred_region
        %s165 = ssub.s32 %s15, 1
        // Predicated region
        $region13: #{tpu_custom_call.1} parent=11 // pred_check
          %p166 = pneg %p62
        $region14: #{tpu_custom_call.1} parent=11 // pred_check_branch
          %168 = sbr.rel (%p166) target = $region16
        $region15: #{tpu_custom_call.1} parent=11 // pred_region
          _
        $region16: #{tpu_custom_call.1} parent=11 // pred_fallthru
          _
        // Predicated region
        $region17: #{tpu_custom_call.1} parent=11 // pred_check
          %p169 = pneg %p83
        $region18: #{tpu_custom_call.1} parent=11 // pred_check_branch
          %171 = sbr.rel (%p169) target = $region20
        $region19: #{tpu_custom_call.1} parent=11 // pred_region
          _
        $region20: #{tpu_custom_call.1} parent=11 // pred_fallthru
          _
        // Predicated region
        $region21: #{tpu_custom_call.1} parent=11 // pred_check
          %p172 = pneg %p104
        $region22: #{tpu_custom_call.1} parent=11 // pred_check_branch
          %174 = sbr.rel (%p172) target = $region24
        $region23: #{tpu_custom_call.1} parent=11 // pred_region
          %176 = vsyncadd [#allocation3], 0
          %s177 = sshll.u32 %s3, 4
          %s178 = int_to_ptr.hbm [resolvable:$true] %s177
          %s179 = sshll.u32 [#allocation2], 4
          %s180 = int_to_ptr.vmem [resolvable:$true] %s179
          %185 = dma.hbm_to_vmem [thread:$0]  %s178, 1024, %s180, [#allocation3], 64, 64, 4
        $region24: #{tpu_custom_call.1} parent=11 // pred_fallthru
          _
        // Predicated region
        $region25: #{tpu_custom_call.1} parent=11 // pred_check
          %p186 = pneg %p125
        $region26: #{tpu_custom_call.1} parent=11 // pred_check_branch
          %188 = sbr.rel (%p186) target = $region28
        $region27: #{tpu_custom_call.1} parent=11 // pred_region
          _
        $region28: #{tpu_custom_call.1} parent=11 // pred_fallthru
          _
      $region12: #{tpu_custom_call.1} parent=5 // pred_fallthru
        _
      %p189 = scmp.lt.s32.totalorder %s15, 2
      // Predicated region
      $region29: #{tpu_custom_call.1} parent=5 // pred_check
        %p190 = pneg %p189
      $region30: #{tpu_custom_call.1} parent=5 // pred_check_branch
        %192 = sbr.rel (%p190) target = $region32
      $region31: #{tpu_custom_call.1} parent=5 // pred_region
        // Predicated region
        $region33: #{tpu_custom_call.1} parent=31 // pred_check
          %p193 = pneg %p35
        $region34: #{tpu_custom_call.1} parent=31 // pred_check_branch
          %195 = sbr.rel (%p193) target = $region36
        $region35: #{tpu_custom_call.1} parent=31 // pred_region
          %s196 = smul.u32 16, %s15
          %p197 = scmp.lt.s32.totalorder %s196, 31
          %s198 = scalar_select %p197, %s196, 31
          %s199 = smul.addr %s198, 4
          %s200 = scalar_lea.vmem %s0, %s199
          %s201 = smul.u32 16, %s15
        $region36: #{tpu_custom_call.1} parent=31 // pred_fallthru
          _
      $region32: #{tpu_custom_call.1} parent=5 // pred_fallthru
        _
      %p202 = scmp.le.s32.totalorder 1, %s15
      %p203 = scmp.lt.s32.totalorder %s15, 3
      %p204 = pnand %p202, %p203
      %p205 = pneg %p204
      // Predicated region
      $region37: #{tpu_custom_call.1} parent=5 // pred_check
        _
      $region38: #{tpu_custom_call.1} parent=5 // pred_check_branch
        %207 = sbr.rel (%p204) target = $region40
      $region39: #{tpu_custom_call.1} parent=5 // pred_region
        %s208 = ssub.s32 %s15, 1
        // Predicated region
        $region41: #{tpu_custom_call.1} parent=39 // pred_check
          %p209 = pneg %p104
        $region42: #{tpu_custom_call.1} parent=39 // pred_check_branch
          %211 = sbr.rel (%p209) target = $region44
        $region43: #{tpu_custom_call.1} parent=39 // pred_region
          %213 = dma.done [#allocation3], 1024
        $region44: #{tpu_custom_call.1} parent=39 // pred_fallthru
          _
        %s214 = smul.u32 16, %s20
        %p215 = scmp.lt.s32.totalorder %s214, 31
        %s216 = scalar_select %p215, %s214, 31
        %s217 = smul.addr %s216, 4
        %s218 = scalar_lea.vmem %s0, %s217
        %p219 = pneg %p41
        %p220 = pneg %p38
        %p221 = pneg %p62
        %p222 = pneg %p59
        %p223 = pneg %p83
        %p224 = pneg %p80
        %p225 = pneg %p104
        %p226 = pneg %p101
        %p227 = pneg %p125
        %p228 = pneg %p122
        %p229 = pneg %p151
        %p230 = pneg %p148
        %s231 = sand.u32 %s138, 1
        %s232 = scalar_lea.sflag [#allocation4], %s231
        %s233 = sand.u32 %s138, 1
        %s234 = smul.addr %s233, 128
        %s235 = scalar_lea.vmem [#allocation5], %s234
        %s236 = smul.u32 16, %s20
        %p237 = scmp.lt.s32.totalorder %s236, 31
        %s238 = scalar_select %p237, %s236, 31
        %s239 = smul.addr %s238, 4
        %s240 = scalar_lea.vmem %s0, %s239
        %s241 = smul.u32 16, %s20
        %s242 = smul.u32 16, %s20
        %v244 = vld [vmem:[%s240] sm:$0xf]
        %v245 = vld [vmem:[%s240 + $0x4] sm:$0xf]
        %v246 = vld [vmem:[%s240 + $0x8] sm:$0xf]
        %v247 = vld [vmem:[%s240 + $0xc] sm:$0xf]
        %v248 = vld [vmem:[%s240 + $0x10] sm:$0xf]
        %v249 = vld [vmem:[%s240 + $0x14] sm:$0xf]
        %v250 = vld [vmem:[%s240 + $0x18] sm:$0xf]
        %v251 = vld [vmem:[%s240 + $0x1c] sm:$0xf]
        %v252 = vld [vmem:[%s240 + $0x20] sm:$0xf]
        %v253 = vld [vmem:[%s240 + $0x24] sm:$0xf]
        %v254 = vld [vmem:[%s240 + $0x28] sm:$0xf]
        %v255 = vld [vmem:[%s240 + $0x2c] sm:$0xf]
        %v256 = vld [vmem:[%s240 + $0x30] sm:$0xf]
        %v257 = vld [vmem:[%s240 + $0x34] sm:$0xf]
        %v258 = vld [vmem:[%s240 + $0x38] sm:$0xf]
        %v259 = vld [vmem:[%s240 + $0x3c] sm:$0xf]
        %v260 = vld [vmem:[%s1] sm:$0xf]
        %v261 = vld [vmem:[%s4] sm:$0x1]
        %v262 = vperm.slane %v261, 0
        %v279 = vunpack.c.l.b16 %v244
        %v280 = vunpack.c.l.b16 %v245
        %v281 = vunpack.c.l.b16 %v246
        %v282 = vunpack.c.l.b16 %v247
        %v283 = vunpack.c.l.b16 %v248
        %v284 = vunpack.c.l.b16 %v249
        %v285 = vunpack.c.l.b16 %v250
        %v286 = vunpack.c.l.b16 %v251
        %v287 = vunpack.c.l.b16 %v252
        %v288 = vunpack.c.l.b16 %v253
        %v289 = vunpack.c.l.b16 %v254
        %v290 = vunpack.c.l.b16 %v255
        %v291 = vunpack.c.l.b16 %v256
        %v292 = vunpack.c.l.b16 %v257
        %v293 = vunpack.c.l.b16 %v258
        %v294 = vunpack.c.l.b16 %v259
        %v295 = vpack.c.b16 %v280, %v279
        %v296 = vpack.c.b16 %v282, %v281
        %v297 = vpack.c.b16 %v284, %v283
        %v298 = vpack.c.b16 %v286, %v285
        %v299 = vpack.c.b16 %v288, %v287
        %v300 = vpack.c.b16 %v290, %v289
        %v301 = vpack.c.b16 %v292, %v291
        %v302 = vpack.c.b16 %v294, %v293
        %vm303 = vcmask 64512
        %v305 = vsel %vm303, %v295, 0
        %v308 = vsel %vm303, %v296, 0
        %v311 = vsel %vm303, %v297, 0
        %v314 = vsel %vm303, %v298, 0
        %v317 = vsel %vm303, %v299, 0
        %v320 = vsel %vm303, %v300, 0
        %v323 = vsel %vm303, %v301, 0
        %v326 = vsel %vm303, %v302, 0
        %vm328 = vcmask 1043456
        %v330 = vsel %vm328, %v260, 0
        %332 = vmatpush.bf16.msra.mxu0 0
        %333 = vmatpush.bf16.msra.mxu0 0
        %334 = vmatpush.bf16.msra.mxu0 0
        %335 = vmatpush.bf16.msra.mxu0 0
        %336 = vmatpush.bf16.msra.mxu0 0
        %337 = vmatpush.bf16.msra.mxu0 0
        %338 = vmatpush.bf16.msra.mxu0 0
        %339 = vmatpush.bf16.msra.mxu0 %v330
        %340 = vmatmul.bf16.gmra.mxu0 %v305
        %v341 = vpop.f32.mrf.mxu0
        %v342 = vadd.f32 %v262, %v341
        %v343 = vpop.f32.mrf.mxu0
        %v344 = vadd.f32 %v262, %v343
        %345 = vmatmul.bf16.gmra.mxu0 %v308
        %v346 = vpop.f32.mrf.mxu0
        %v347 = vadd.f32 %v262, %v346
        %v348 = vpop.f32.mrf.mxu0
        %v349 = vadd.f32 %v262, %v348
        %350 = vmatmul.bf16.gmra.mxu0 %v311
        %v351 = vpop.f32.mrf.mxu0
        %v352 = vadd.f32 %v262, %v351
        %v353 = vpop.f32.mrf.mxu0
        %v354 = vadd.f32 %v262, %v353
        %355 = vmatmul.bf16.gmra.mxu0 %v314
        %v356 = vpop.f32.mrf.mxu0
        %v357 = vadd.f32 %v262, %v356
        %v358 = vpop.f32.mrf.mxu0
        %v359 = vadd.f32 %v262, %v358
        %360 = vmatmul.bf16.gmra.mxu0 %v317
        %v361 = vpop.f32.mrf.mxu0
        %v362 = vadd.f32 %v262, %v361
        %v363 = vpop.f32.mrf.mxu0
        %v364 = vadd.f32 %v262, %v363
        %365 = vmatmul.bf16.gmra.mxu0 %v320
        %v366 = vpop.f32.mrf.mxu0
        %v367 = vadd.f32 %v262, %v366
        %v368 = vpop.f32.mrf.mxu0
        %v369 = vadd.f32 %v262, %v368
        %370 = vmatmul.bf16.gmra.mxu0 %v323
        %v371 = vpop.f32.mrf.mxu0
        %v372 = vadd.f32 %v262, %v371
        %v373 = vpop.f32.mrf.mxu0
        %v374 = vadd.f32 %v262, %v373
        %375 = vmatmul.bf16.gmra.mxu0 %v326
        %v376 = vpop.f32.mrf.mxu0
        %v377 = vadd.f32 %v262, %v376
        %v378 = vpop.f32.mrf.mxu0
        %v379 = vadd.f32 %v262, %v378
        %380 = vdwg.mxu0
        %v381 = vtanh.pop %v342
        %v382 = vtanh.pop %v344
        %v383 = vtanh.pop %v347
        %v384 = vtanh.pop %v349
        %v385 = vtanh.pop %v352
        %v386 = vtanh.pop %v354
        %v387 = vtanh.pop %v357
        %v388 = vtanh.pop %v359
        %v389 = vtanh.pop %v362
        %v390 = vtanh.pop %v364
        %v391 = vtanh.pop %v367
        %v392 = vtanh.pop %v369
        %v393 = vtanh.pop %v372
        %v394 = vtanh.pop %v374
        %v395 = vtanh.pop %v377
        %v396 = vtanh.pop %v379
        %v397 = vpack.c.bf16 %v382, %v381
        %v398 = vpack.c.bf16 %v384, %v383
        %v399 = vpack.c.bf16 %v386, %v385
        %v400 = vpack.c.bf16 %v388, %v387
        %v401 = vpack.c.bf16 %v390, %v389
        %v402 = vpack.c.bf16 %v392, %v391
        %v403 = vpack.c.bf16 %v394, %v393
        %v404 = vpack.c.bf16 %v396, %v395
        %v405 = vld [vmem:[%s2] sm:$0xf]
        %v406 = vld [vmem:[%s2 + $0x4] sm:$0xf]
        %v407 = vld [vmem:[%s2 + $0x8] sm:$0xf]
        %v408 = vld [vmem:[%s2 + $0xc] sm:$0xf]
        %v409 = vld [vmem:[%s2 + $0x10] sm:$0xf]
        %v410 = vld [vmem:[%s2 + $0x14] sm:$0xf]
        %v411 = vld [vmem:[%s2 + $0x18] sm:$0xf]
        %v412 = vld [vmem:[%s2 + $0x1c] sm:$0xf]
        %v413 = vld [vmem:[%s2 + $0x20] sm:$0xf]
        %v414 = vld [vmem:[%s2 + $0x24] sm:$0xf]
        %v415 = vld [vmem:[%s2 + $0x28] sm:$0xf]
        %v416 = vld [vmem:[%s2 + $0x2c] sm:$0xf]
        %v417 = vld [vmem:[%s2 + $0x30] sm:$0xf]
        %v418 = vld [vmem:[%s2 + $0x34] sm:$0xf]
        %v419 = vld [vmem:[%s2 + $0x38] sm:$0xf]
        %v420 = vld [vmem:[%s2 + $0x3c] sm:$0xf]
        %v421 = vld [vmem:[%s4 + $0x1] sm:$0x1]
        %v422 = vperm.slane %v421, 0
        %v439 = vunpack.c.l.b16 %v405
        %v440 = vunpack.c.l.b16 %v406
        %v441 = vunpack.c.l.b16 %v407
        %v442 = vunpack.c.l.b16 %v408
        %v443 = vunpack.c.l.b16 %v409
        %v444 = vunpack.c.l.b16 %v410
        %v445 = vunpack.c.l.b16 %v411
        %v446 = vunpack.c.l.b16 %v412
        %v447 = vunpack.c.l.b16 %v413
        %v448 = vunpack.c.l.b16 %v414
        %v449 = vunpack.c.l.b16 %v415
        %v450 = vunpack.c.l.b16 %v416
        %v451 = vunpack.c.l.b16 %v417
        %v452 = vunpack.c.l.b16 %v418
        %v453 = vunpack.c.l.b16 %v419
        %v454 = vunpack.c.l.b16 %v420
        %v455 = vpack.c.b16 %v440, %v439
        %v456 = vpack.c.b16 %v442, %v441
        %v457 = vpack.c.b16 %v444, %v443
        %v458 = vpack.c.b16 %v446, %v445
        %v459 = vpack.c.b16 %v448, %v447
        %v460 = vpack.c.b16 %v450, %v449
        %v461 = vpack.c.b16 %v452, %v451
        %v462 = vpack.c.b16 %v454, %v453
        %471 = vmatpush.bf16.msra.mxu0 %v462
        %472 = vmatpush.bf16.msra.mxu0 %v461
        %473 = vmatpush.bf16.msra.mxu0 %v460
        %474 = vmatpush.bf16.msra.mxu0 %v459
        %475 = vmatpush.bf16.msra.mxu0 %v458
        %476 = vmatpush.bf16.msra.mxu0 %v457
        %477 = vmatpush.bf16.msra.mxu0 %v456
        %478 = vmatpush.bf16.msra.mxu0 %v455
        %479 = vmatmul.bf16.gmra.mxu0 %v397
        %v480 = vpop.f32.mrf.mxu0
        %v481 = vadd.f32 %v422, %v480
        %v482 = vpop.f32.mrf.mxu0
        %v483 = vadd.f32 %v422, %v482
        %484 = vmatmul.bf16.gmra.mxu0 %v398
        %v485 = vpop.f32.mrf.mxu0
        %v486 = vadd.f32 %v422, %v485
        %v487 = vpop.f32.mrf.mxu0
        %v488 = vadd.f32 %v422, %v487
        %489 = vmatmul.bf16.gmra.mxu0 %v399
        %v490 = vpop.f32.mrf.mxu0
        %v491 = vadd.f32 %v422, %v490
        %v492 = vpop.f32.mrf.mxu0
        %v493 = vadd.f32 %v422, %v492
        %494 = vmatmul.bf16.gmra.mxu0 %v400
        %v495 = vpop.f32.mrf.mxu0
        %v496 = vadd.f32 %v422, %v495
        %v497 = vpop.f32.mrf.mxu0
        %v498 = vadd.f32 %v422, %v497
        %499 = vmatmul.bf16.gmra.mxu0 %v401
        %v500 = vpop.f32.mrf.mxu0
        %v501 = vadd.f32 %v422, %v500
        %v502 = vpop.f32.mrf.mxu0
        %v503 = vadd.f32 %v422, %v502
        %504 = vmatmul.bf16.gmra.mxu0 %v402
        %v505 = vpop.f32.mrf.mxu0
        %v506 = vadd.f32 %v422, %v505
        %v507 = vpop.f32.mrf.mxu0
        %v508 = vadd.f32 %v422, %v507
        %509 = vmatmul.bf16.gmra.mxu0 %v403
        %v510 = vpop.f32.mrf.mxu0
        %v511 = vadd.f32 %v422, %v510
        %v512 = vpop.f32.mrf.mxu0
        %v513 = vadd.f32 %v422, %v512
        %514 = vmatmul.bf16.gmra.mxu0 %v404
        %v515 = vpop.f32.mrf.mxu0
        %v516 = vadd.f32 %v422, %v515
        %v517 = vpop.f32.mrf.mxu0
        %v518 = vadd.f32 %v422, %v517
        %519 = vdwg.mxu0
        %v520 = vtanh.pop %v481
        %v521 = vtanh.pop %v483
        %v522 = vtanh.pop %v486
        %v523 = vtanh.pop %v488
        %v524 = vtanh.pop %v491
        %v525 = vtanh.pop %v493
        %v526 = vtanh.pop %v496
        %v527 = vtanh.pop %v498
        %v528 = vtanh.pop %v501
        %v529 = vtanh.pop %v503
        %v530 = vtanh.pop %v506
        %v531 = vtanh.pop %v508
        %v532 = vtanh.pop %v511
        %v533 = vtanh.pop %v513
        %v534 = vtanh.pop %v516
        %v535 = vtanh.pop %v518
        %v536 = vpack.c.bf16 %v521, %v520
        %v537 = vpack.c.bf16 %v523, %v522
        %v538 = vpack.c.bf16 %v525, %v524
        %v539 = vpack.c.bf16 %v527, %v526
        %v540 = vpack.c.bf16 %v529, %v528
        %v541 = vpack.c.bf16 %v531, %v530
        %v542 = vpack.c.bf16 %v533, %v532
        %v543 = vpack.c.bf16 %v535, %v534
        %s544 = scalar_lea.vmem %s2, 64
        %v545 = vld [vmem:[%s544] sm:$0xf]
        %v546 = vld [vmem:[%s544 + $0x4] sm:$0xf]
        %v547 = vld [vmem:[%s544 + $0x8] sm:$0xf]
        %v548 = vld [vmem:[%s544 + $0xc] sm:$0xf]
        %v549 = vld [vmem:[%s544 + $0x10] sm:$0xf]
        %v550 = vld [vmem:[%s544 + $0x14] sm:$0xf]
        %v551 = vld [vmem:[%s544 + $0x18] sm:$0xf]
        %v552 = vld [vmem:[%s544 + $0x1c] sm:$0xf]
        %v553 = vld [vmem:[%s544 + $0x20] sm:$0xf]
        %v554 = vld [vmem:[%s544 + $0x24] sm:$0xf]
        %v555 = vld [vmem:[%s544 + $0x28] sm:$0xf]
        %v556 = vld [vmem:[%s544 + $0x2c] sm:$0xf]
        %v557 = vld [vmem:[%s544 + $0x30] sm:$0xf]
        %v558 = vld [vmem:[%s544 + $0x34] sm:$0xf]
        %v559 = vld [vmem:[%s544 + $0x38] sm:$0xf]
        %v560 = vld [vmem:[%s544 + $0x3c] sm:$0xf]
        %v561 = vld [vmem:[%s4 + $0x2] sm:$0x1]
        %v562 = vperm.slane %v561, 0
        %v579 = vunpack.c.l.b16 %v545
        %v580 = vunpack.c.l.b16 %v546
        %v581 = vunpack.c.l.b16 %v547
        %v582 = vunpack.c.l.b16 %v548
        %v583 = vunpack.c.l.b16 %v549
        %v584 = vunpack.c.l.b16 %v550
        %v585 = vunpack.c.l.b16 %v551
        %v586 = vunpack.c.l.b16 %v552
        %v587 = vunpack.c.l.b16 %v553
        %v588 = vunpack.c.l.b16 %v554
        %v589 = vunpack.c.l.b16 %v555
        %v590 = vunpack.c.l.b16 %v556
        %v591 = vunpack.c.l.b16 %v557
        %v592 = vunpack.c.l.b16 %v558
        %v593 = vunpack.c.l.b16 %v559
        %v594 = vunpack.c.l.b16 %v560
        %v595 = vpack.c.b16 %v580, %v579
        %v596 = vpack.c.b16 %v582, %v581
        %v597 = vpack.c.b16 %v584, %v583
        %v598 = vpack.c.b16 %v586, %v585
        %v599 = vpack.c.b16 %v588, %v587
        %v600 = vpack.c.b16 %v590, %v589
        %v601 = vpack.c.b16 %v592, %v591
        %v602 = vpack.c.b16 %v594, %v593
        %611 = vmatpush.bf16.msra.mxu0 %v602
        %612 = vmatpush.bf16.msra.mxu0 %v601
        %613 = vmatpush.bf16.msra.mxu0 %v600
        %614 = vmatpush.bf16.msra.mxu0 %v599
        %615 = vmatpush.bf16.msra.mxu0 %v598
        %616 = vmatpush.bf16.msra.mxu0 %v597
        %617 = vmatpush.bf16.msra.mxu0 %v596
        %618 = vmatpush.bf16.msra.mxu0 %v595
        %619 = vmatmul.bf16.gmra.mxu0 %v536
        %v620 = vpop.f32.mrf.mxu0
        %v621 = vadd.f32 %v562, %v620
        %v622 = vpop.f32.mrf.mxu0
        %v623 = vadd.f32 %v562, %v622
        %624 = vmatmul.bf16.gmra.mxu0 %v537
        %v625 = vpop.f32.mrf.mxu0
        %v626 = vadd.f32 %v562, %v625
        %v627 = vpop.f32.mrf.mxu0
        %v628 = vadd.f32 %v562, %v627
        %629 = vmatmul.bf16.gmra.mxu0 %v538
        %v630 = vpop.f32.mrf.mxu0
        %v631 = vadd.f32 %v562, %v630
        %v632 = vpop.f32.mrf.mxu0
        %v633 = vadd.f32 %v562, %v632
        %634 = vmatmul.bf16.gmra.mxu0 %v539
        %v635 = vpop.f32.mrf.mxu0
        %v636 = vadd.f32 %v562, %v635
        %v637 = vpop.f32.mrf.mxu0
        %v638 = vadd.f32 %v562, %v637
        %639 = vmatmul.bf16.gmra.mxu0 %v540
        %v640 = vpop.f32.mrf.mxu0
        %v641 = vadd.f32 %v562, %v640
        %v642 = vpop.f32.mrf.mxu0
        %v643 = vadd.f32 %v562, %v642
        %644 = vmatmul.bf16.gmra.mxu0 %v541
        %v645 = vpop.f32.mrf.mxu0
        %v646 = vadd.f32 %v562, %v645
        %v647 = vpop.f32.mrf.mxu0
        %v648 = vadd.f32 %v562, %v647
        %649 = vmatmul.bf16.gmra.mxu0 %v542
        %v650 = vpop.f32.mrf.mxu0
        %v651 = vadd.f32 %v562, %v650
        %v652 = vpop.f32.mrf.mxu0
        %v653 = vadd.f32 %v562, %v652
        %654 = vmatmul.bf16.gmra.mxu0 %v543
        %v655 = vpop.f32.mrf.mxu0
        %v656 = vadd.f32 %v562, %v655
        %v657 = vpop.f32.mrf.mxu0
        %v658 = vadd.f32 %v562, %v657
        %659 = vdwg.mxu0
        %v660 = vtanh.pop %v621
        %v661 = vtanh.pop %v623
        %v662 = vtanh.pop %v626
        %v663 = vtanh.pop %v628
        %v664 = vtanh.pop %v631
        %v665 = vtanh.pop %v633
        %v666 = vtanh.pop %v636
        %v667 = vtanh.pop %v638
        %v668 = vtanh.pop %v641
        %v669 = vtanh.pop %v643
        %v670 = vtanh.pop %v646
        %v671 = vtanh.pop %v648
        %v672 = vtanh.pop %v651
        %v673 = vtanh.pop %v653
        %v674 = vtanh.pop %v656
        %v675 = vtanh.pop %v658
        %v676 = vpack.c.bf16 %v661, %v660
        %v677 = vpack.c.bf16 %v663, %v662
        %v678 = vpack.c.bf16 %v665, %v664
        %v679 = vpack.c.bf16 %v667, %v666
        %v680 = vpack.c.bf16 %v669, %v668
        %v681 = vpack.c.bf16 %v671, %v670
        %v682 = vpack.c.bf16 %v673, %v672
        %v683 = vpack.c.bf16 %v675, %v674
        %v684 = vld [vmem:[#allocation2] sm:$0xf]
        %v685 = vld [vmem:[#allocation2 + $0x4] sm:$0xf]
        %v686 = vld [vmem:[#allocation2 + $0x8] sm:$0xf]
        %v687 = vld [vmem:[#allocation2 + $0xc] sm:$0xf]
        %v688 = vld [vmem:[#allocation2 + $0x10] sm:$0xf]
        %v689 = vld [vmem:[#allocation2 + $0x14] sm:$0xf]
        %v690 = vld [vmem:[#allocation2 + $0x18] sm:$0xf]
        %v691 = vld [vmem:[#allocation2 + $0x1c] sm:$0xf]
        %v692 = vld [vmem:[#allocation2 + $0x20] sm:$0xf]
        %v693 = vld [vmem:[#allocation2 + $0x24] sm:$0xf]
        %v694 = vld [vmem:[#allocation2 + $0x28] sm:$0xf]
        %v695 = vld [vmem:[#allocation2 + $0x2c] sm:$0xf]
        %v696 = vld [vmem:[#allocation2 + $0x30] sm:$0xf]
        %v697 = vld [vmem:[#allocation2 + $0x34] sm:$0xf]
        %v698 = vld [vmem:[#allocation2 + $0x38] sm:$0xf]
        %v699 = vld [vmem:[#allocation2 + $0x3c] sm:$0xf]
        %v700 = vld [vmem:[%s4 + $0x3] sm:$0x1]
        %v701 = vperm.slane %v700, 0
        %v718 = vunpack.c.l.b16 %v684
        %v719 = vunpack.c.l.b16 %v685
        %v720 = vunpack.c.l.b16 %v686
        %v721 = vunpack.c.l.b16 %v687
        %v722 = vunpack.c.l.b16 %v688
        %v723 = vunpack.c.l.b16 %v689
        %v724 = vunpack.c.l.b16 %v690
        %v725 = vunpack.c.l.b16 %v691
        %v726 = vunpack.c.l.b16 %v692
        %v727 = vunpack.c.l.b16 %v693
        %v728 = vunpack.c.l.b16 %v694
        %v729 = vunpack.c.l.b16 %v695
        %v730 = vunpack.c.l.b16 %v696
        %v731 = vunpack.c.l.b16 %v697
        %v732 = vunpack.c.l.b16 %v698
        %v733 = vunpack.c.l.b16 %v699
        %v734 = vpack.c.b16 %v719, %v718
        %v735 = vpack.c.b16 %v721, %v720
        %v736 = vpack.c.b16 %v723, %v722
        %v737 = vpack.c.b16 %v725, %v724
        %v738 = vpack.c.b16 %v727, %v726
        %v739 = vpack.c.b16 %v729, %v728
        %v740 = vpack.c.b16 %v731, %v730
        %v741 = vpack.c.b16 %v733, %v732
        %750 = vmatpush.bf16.msra.mxu0 %v741
        %751 = vmatpush.bf16.msra.mxu0 %v740
        %752 = vmatpush.bf16.msra.mxu0 %v739
        %753 = vmatpush.bf16.msra.mxu0 %v738
        %754 = vmatpush.bf16.msra.mxu0 %v737
        %755 = vmatpush.bf16.msra.mxu0 %v736
        %756 = vmatpush.bf16.msra.mxu0 %v735
        %757 = vmatpush.bf16.msra.mxu0 %v734
        %758 = vmatmul.bf16.gmra.mxu0 %v676
        %v759 = vpop.f32.mrf.mxu0
        %v760 = vadd.f32 %v701, %v759
        %v761 = vpop.f32.mrf.mxu0
        %v762 = vadd.f32 %v701, %v761
        %763 = vmatmul.bf16.gmra.mxu0 %v677
        %v764 = vpop.f32.mrf.mxu0
        %v765 = vadd.f32 %v701, %v764
        %v766 = vpop.f32.mrf.mxu0
        %v767 = vadd.f32 %v701, %v766
        %768 = vmatmul.bf16.gmra.mxu0 %v678
        %v769 = vpop.f32.mrf.mxu0
        %v770 = vadd.f32 %v701, %v769
        %v771 = vpop.f32.mrf.mxu0
        %v772 = vadd.f32 %v701, %v771
        %773 = vmatmul.bf16.gmra.mxu0 %v679
        %v774 = vpop.f32.mrf.mxu0
        %v775 = vadd.f32 %v701, %v774
        %v776 = vpop.f32.mrf.mxu0
        %v777 = vadd.f32 %v701, %v776
        %778 = vmatmul.bf16.gmra.mxu0 %v680
        %v779 = vpop.f32.mrf.mxu0
        %v780 = vadd.f32 %v701, %v779
        %v781 = vpop.f32.mrf.mxu0
        %v782 = vadd.f32 %v701, %v781
        %783 = vmatmul.bf16.gmra.mxu0 %v681
        %v784 = vpop.f32.mrf.mxu0
        %v785 = vadd.f32 %v701, %v784
        %v786 = vpop.f32.mrf.mxu0
        %v787 = vadd.f32 %v701, %v786
        %788 = vmatmul.bf16.gmra.mxu0 %v682
        %v789 = vpop.f32.mrf.mxu0
        %v790 = vadd.f32 %v701, %v789
        %v791 = vpop.f32.mrf.mxu0
        %v792 = vadd.f32 %v701, %v791
        %793 = vmatmul.bf16.gmra.mxu0 %v683
        %v794 = vpop.f32.mrf.mxu0
        %v795 = vadd.f32 %v701, %v794
        %v796 = vpop.f32.mrf.mxu0
        %v797 = vadd.f32 %v701, %v796
        %798 = vdwg.mxu0
        %799 = vmax.xlane.f32.xlu0 %v760
        %v800 = vpop.xlane.xlu0 %799
        %801 = vmax.xlane.f32.xlu0 %v762
        %v802 = vpop.xlane.xlu0 %801
        %803 = vmax.xlane.f32.xlu0 %v765
        %v804 = vpop.xlane.xlu0 %803
        %805 = vmax.xlane.f32.xlu0 %v767
        %v806 = vpop.xlane.xlu0 %805
        %807 = vmax.xlane.f32.xlu0 %v770
        %v808 = vpop.xlane.xlu0 %807
        %809 = vmax.xlane.f32.xlu0 %v772
        %v810 = vpop.xlane.xlu0 %809
        %811 = vmax.xlane.f32.xlu0 %v775
        %v812 = vpop.xlane.xlu0 %811
        %813 = vmax.xlane.f32.xlu0 %v777
        %v814 = vpop.xlane.xlu0 %813
        %815 = vmax.xlane.f32.xlu0 %v780
        %v816 = vpop.xlane.xlu0 %815
        %817 = vmax.xlane.f32.xlu0 %v782
        %v818 = vpop.xlane.xlu0 %817
        %819 = vmax.xlane.f32.xlu0 %v785
        %v820 = vpop.xlane.xlu0 %819
        %821 = vmax.xlane.f32.xlu0 %v787
        %v822 = vpop.xlane.xlu0 %821
        %823 = vmax.xlane.f32.xlu0 %v790
        %v824 = vpop.xlane.xlu0 %823
        %825 = vmax.xlane.f32.xlu0 %v792
        %v826 = vpop.xlane.xlu0 %825
        %827 = vmax.xlane.f32.xlu0 %v795
        %v828 = vpop.xlane.xlu0 %827
        %829 = vmax.xlane.f32.xlu0 %v797
        %v830 = vpop.xlane.xlu0 %829
        %v831 = vsub.f32 %v760, %v800
        %v832 = vsub.f32 %v762, %v802
        %v833 = vsub.f32 %v765, %v804
        %v834 = vsub.f32 %v767, %v806
        %v835 = vsub.f32 %v770, %v808
        %v836 = vsub.f32 %v772, %v810
        %v837 = vsub.f32 %v775, %v812
        %v838 = vsub.f32 %v777, %v814
        %v839 = vsub.f32 %v780, %v816
        %v840 = vsub.f32 %v782, %v818
        %v841 = vsub.f32 %v785, %v820
        %v842 = vsub.f32 %v787, %v822
        %v843 = vsub.f32 %v790, %v824
        %v844 = vsub.f32 %v792, %v826
        %v845 = vsub.f32 %v795, %v828
        %v846 = vsub.f32 %v797, %v830
        %v847 = vmul.f32 %v831, 1.442695
        %v848 = vpow.pop %v847
        %v849 = vmul.f32 %v832, 1.442695
        %v850 = vpow.pop %v849
        %v851 = vmul.f32 %v833, 1.442695
        %v852 = vpow.pop %v851
        %v853 = vmul.f32 %v834, 1.442695
        %v854 = vpow.pop %v853
        %v855 = vmul.f32 %v835, 1.442695
        %v856 = vpow.pop %v855
        %v857 = vmul.f32 %v836, 1.442695
        %v858 = vpow.pop %v857
        %v859 = vmul.f32 %v837, 1.442695
        %v860 = vpow.pop %v859
        %v861 = vmul.f32 %v838, 1.442695
        %v862 = vpow.pop %v861
        %v863 = vmul.f32 %v839, 1.442695
        %v864 = vpow.pop %v863
        %v865 = vmul.f32 %v840, 1.442695
        %v866 = vpow.pop %v865
        %v867 = vmul.f32 %v841, 1.442695
        %v868 = vpow.pop %v867
        %v869 = vmul.f32 %v842, 1.442695
        %v870 = vpow.pop %v869
        %v871 = vmul.f32 %v843, 1.442695
        %v872 = vpow.pop %v871
        %v873 = vmul.f32 %v844, 1.442695
        %v874 = vpow.pop %v873
        %v875 = vmul.f32 %v845, 1.442695
        %v876 = vpow.pop %v875
        %v877 = vmul.f32 %v846, 1.442695
        %v878 = vpow.pop %v877
        %879 = vadd.xlane.f32.xlu0 %v848
        %v880 = vpop.xlane.xlu0 %879
        %881 = vadd.xlane.f32.xlu0 %v850
        %v882 = vpop.xlane.xlu0 %881
        %883 = vadd.xlane.f32.xlu0 %v852
        %v884 = vpop.xlane.xlu0 %883
        %885 = vadd.xlane.f32.xlu0 %v854
        %v886 = vpop.xlane.xlu0 %885
        %887 = vadd.xlane.f32.xlu0 %v856
        %v888 = vpop.xlane.xlu0 %887
        %889 = vadd.xlane.f32.xlu0 %v858
        %v890 = vpop.xlane.xlu0 %889
        %891 = vadd.xlane.f32.xlu0 %v860
        %v892 = vpop.xlane.xlu0 %891
        %893 = vadd.xlane.f32.xlu0 %v862
        %v894 = vpop.xlane.xlu0 %893
        %895 = vadd.xlane.f32.xlu0 %v864
        %v896 = vpop.xlane.xlu0 %895
        %897 = vadd.xlane.f32.xlu0 %v866
        %v898 = vpop.xlane.xlu0 %897
        %899 = vadd.xlane.f32.xlu0 %v868
        %v900 = vpop.xlane.xlu0 %899
        %901 = vadd.xlane.f32.xlu0 %v870
        %v902 = vpop.xlane.xlu0 %901
        %903 = vadd.xlane.f32.xlu0 %v872
        %v904 = vpop.xlane.xlu0 %903
        %905 = vadd.xlane.f32.xlu0 %v874
        %v906 = vpop.xlane.xlu0 %905
        %907 = vadd.xlane.f32.xlu0 %v876
        %v908 = vpop.xlane.xlu0 %907
        %909 = vadd.xlane.f32.xlu0 %v878
        %v910 = vpop.xlane.xlu0 %909
        %v911 = vlog2.pop %v880
        %v912 = vmul.f32 %v911, 0.6931472
        %v913 = vlog2.pop %v882
        %v914 = vmul.f32 %v913, 0.6931472
        %v915 = vlog2.pop %v884
        %v916 = vmul.f32 %v915, 0.6931472
        %v917 = vlog2.pop %v886
        %v918 = vmul.f32 %v917, 0.6931472
        %v919 = vlog2.pop %v888
        %v920 = vmul.f32 %v919, 0.6931472
        %v921 = vlog2.pop %v890
        %v922 = vmul.f32 %v921, 0.6931472
        %v923 = vlog2.pop %v892
        %v924 = vmul.f32 %v923, 0.6931472
        %v925 = vlog2.pop %v894
        %v926 = vmul.f32 %v925, 0.6931472
        %v927 = vlog2.pop %v896
        %v928 = vmul.f32 %v927, 0.6931472
        %v929 = vlog2.pop %v898
        %v930 = vmul.f32 %v929, 0.6931472
        %v931 = vlog2.pop %v900
        %v932 = vmul.f32 %v931, 0.6931472
        %v933 = vlog2.pop %v902
        %v934 = vmul.f32 %v933, 0.6931472
        %v935 = vlog2.pop %v904
        %v936 = vmul.f32 %v935, 0.6931472
        %v937 = vlog2.pop %v906
        %v938 = vmul.f32 %v937, 0.6931472
        %v939 = vlog2.pop %v908
        %v940 = vmul.f32 %v939, 0.6931472
        %v941 = vlog2.pop %v910
        %v942 = vmul.f32 %v941, 0.6931472
        %v943 = vsub.f32 %v831, %v912
        %v944 = vsub.f32 %v832, %v914
        %v945 = vsub.f32 %v833, %v916
        %v946 = vsub.f32 %v834, %v918
        %v947 = vsub.f32 %v835, %v920
        %v948 = vsub.f32 %v836, %v922
        %v949 = vsub.f32 %v837, %v924
        %v950 = vsub.f32 %v838, %v926
        %v951 = vsub.f32 %v839, %v928
        %v952 = vsub.f32 %v840, %v930
        %v953 = vsub.f32 %v841, %v932
        %v954 = vsub.f32 %v842, %v934
        %v955 = vsub.f32 %v843, %v936
        %v956 = vsub.f32 %v844, %v938
        %v957 = vsub.f32 %v845, %v940
        %v958 = vsub.f32 %v846, %v942
        %959 = vst [vmem:[%s235] sm:$0xff] %v943
        %960 = vst [vmem:[%s235 + $0x8] sm:$0xff] %v944
        %961 = vst [vmem:[%s235 + $0x10] sm:$0xff] %v945
        %962 = vst [vmem:[%s235 + $0x18] sm:$0xff] %v946
        %963 = vst [vmem:[%s235 + $0x20] sm:$0xff] %v947
        %964 = vst [vmem:[%s235 + $0x28] sm:$0xff] %v948
        %965 = vst [vmem:[%s235 + $0x30] sm:$0xff] %v949
        %966 = vst [vmem:[%s235 + $0x38] sm:$0xff] %v950
        %967 = vst [vmem:[%s235 + $0x40] sm:$0xff] %v951
        %968 = vst [vmem:[%s235 + $0x48] sm:$0xff] %v952
        %969 = vst [vmem:[%s235 + $0x50] sm:$0xff] %v953
        %970 = vst [vmem:[%s235 + $0x58] sm:$0xff] %v954
        %971 = vst [vmem:[%s235 + $0x60] sm:$0xff] %v955
        %972 = vst [vmem:[%s235 + $0x68] sm:$0xff] %v956
        %973 = vst [vmem:[%s235 + $0x70] sm:$0xff] %v957
        %974 = vst [vmem:[%s235 + $0x78] sm:$0xff] %v958
        %s975 = sand.u32 %s138, 1
        %s976 = scalar_lea.sflag [#allocation4], %s975
        %s977 = sand.u32 %s138, 1
        %s978 = smul.addr %s977, 128
        %s979 = scalar_lea.vmem [#allocation5], %s978
        // Predicated region
        $region45: #{tpu_custom_call.1} parent=39 // pred_check
          %p980 = pneg %p148
        $region46: #{tpu_custom_call.1} parent=39 // pred_check_branch
          %982 = sbr.rel (%p980) target = $region48
        $region47: #{tpu_custom_call.1} parent=39 // pred_region
          %s983 = smul.u32 16, %s20
          %985 = vsyncadd %s976, 0
          %s986 = smul.addr %s983, 8
          %s987 = scalar_lea.hbm %s5, %s986
          %s988 = sshll.u32 %s979, 4
          %s989 = int_to_ptr.vmem [resolvable:$true] %s988
          %s990 = sshll.u32 %s987, 4
          %s991 = int_to_ptr.hbm [resolvable:$true] %s990
          %996 = dma.vmem_to_hbm [thread:$0]  %s989, 2048, %s991, %s976, 128, 128, 8
        $region48: #{tpu_custom_call.1} parent=39 // pred_fallthru
          _
      $region40: #{tpu_custom_call.1} parent=5 // pred_fallthru
        _
      %p997 = scmp.le.s32.totalorder 2, %s15
      // Predicated region
      $region49: #{tpu_custom_call.1} parent=5 // pred_check
        %p998 = pneg %p997
      $region50: #{tpu_custom_call.1} parent=5 // pred_check_branch
        %1000 = sbr.rel (%p998) target = $region52
      $region51: #{tpu_custom_call.1} parent=5 // pred_region
        %s1001 = ssub.s32 %s15, 2
        // Predicated region
        $region53: #{tpu_custom_call.1} parent=51 // pred_check
          %p1002 = pneg %p154
        $region54: #{tpu_custom_call.1} parent=51 // pred_check_branch
          %1004 = sbr.rel (%p1002) target = $region56
        $region55: #{tpu_custom_call.1} parent=51 // pred_region
          %s1005 = sand.u32 %s139, 1
          %s1006 = scalar_lea.sflag [#allocation4], %s1005
          %s1007 = sand.u32 %s139, 1
          %s1008 = smul.addr %s1007, 128
          %s1009 = scalar_lea.vmem [#allocation5], %s1008
          %1011 = dma.done %s1006, 2048
        $region56: #{tpu_custom_call.1} parent=51 // pred_fallthru
          _
      $region52: #{tpu_custom_call.1} parent=5 // pred_fallthru
        _
    $region6: #{tpu_custom_call.1} parent=1 // loop_footer
      %s19 = sadd.s32 1, %s15
    $region7: #{tpu_custom_call.1} parent=1 // loop_footer_branch
      %14 = sbr.rel target = $region3
    $region8: #{tpu_custom_call.1} parent=1 // loop_exit
      _
    %1012 = vsyncpa [#allocation3], 1
    %s1013 = scalar_lea.sflag [#allocation3], 1
    %1014 = vsyncpa %s1013, 1
    %1015 = vsyncpa [#allocation4], 1
    %s1016 = scalar_lea.sflag [#allocation4], 1
    %1017 = vsyncpa %s1016, 1

</llo_original>
